<compile_context>
chip_gen: v6e
topology: v6e:2x2x1
jax: 0.10.0
libtpu: 0.0.40
codegen_flags: <defaults>
</compile_context>

<pallas_src>
import jax
import jax.numpy as jnp
import numpy as np
from jax.experimental import pallas as pl
from jax.experimental.pallas import tpu as pltpu


# ----------------------------------------------------------------------------
# Fused Pallas kernel (all blocks + final linear)
# ----------------------------------------------------------------------------
def _make_tcn_kernel(B, L, k, cfgs):
    """cfgs: list of {"cin", "cout", "d", "has_ds"} per TemporalBlock.

    Ref order: x(B*L,C0) f32,
               per block: w1(k*Cin,Cout) bf16, b1(1,Cout) f32,
                          w2(k*Cout,Cout) bf16, b2(1,Cout) f32,
                          [wd(Cin,Cout) bf16, bd(1,Cout) f32],
               lin_w(Clast,F) bf16, lin_b(1,F) f32,
               out(B,F) f32.
    """

    def kernel(*refs):
        it = iter(refs)
        x_ref = next(it)
        block_refs = []
        for cfg in cfgs:
            n = 6 if cfg["has_ds"] else 4
            block_refs.append([next(it) for _ in range(n)])
        lw_ref = next(it)
        lb_ref = next(it)
        o_ref = next(it)

        # Hoisted time index per flat row (invariant across blocks/taps).
        t_idx = jax.lax.broadcasted_iota(jnp.int32, (B * L, 1), 0) % L

        def shifted(v, shift):
            # Rows delayed by `shift` timesteps; zeros for t < shift (causal
            # left pad).  Rolling the flat (B*L, C) slab only leaks across
            # batch boundaries into rows that are masked to zero anyway.
            if shift == 0:
                return v
            rolled = pltpu.roll(v, shift=shift, axis=0)
            return jnp.where(t_idx < shift, 0.0, rolled)

        def causal_conv(v, w_ref, b_ref, d):
            # im2col: concat the k shifted views along channels -> one MXU
            # matmul (bf16 operands, f32 accumulate), bias in f32.
            P = (k - 1) * d
            cols = jnp.concatenate(
                [shifted(v, P - j * d) for j in range(k)], axis=-1)
            acc = jnp.dot(cols.astype(jnp.bfloat16), w_ref[...],
                          preferred_element_type=jnp.float32)
            return acc + b_ref[...]

        h = x_ref[...]                                   # (B*L, C0) f32
        for cfg, brefs in zip(cfgs, block_refs):
            d = cfg["d"]
            if cfg["has_ds"]:
                w1, b1, w2, b2, wd, bd = brefs
            else:
                w1, b1, w2, b2 = brefs
                wd = bd = None

            h1 = jnp.maximum(causal_conv(h, w1, b1, d), 0.0)    # conv1+ReLU
            h2 = jnp.maximum(causal_conv(h1, w2, b2, d), 0.0)   # conv2+ReLU
            if cfg["has_ds"]:
                res = jnp.dot(h.astype(jnp.bfloat16), wd[...],
                              preferred_element_type=jnp.float32) + bd[...]
            else:
                res = h
            h = jnp.maximum(h2 + res, 0.0)               # residual + ReLU

        c_last = h.shape[-1]
        last = h.reshape(B, L, c_last)[:, L - 1, :]      # last timestep (B,C)
        o_ref[...] = jnp.dot(last.astype(jnp.bfloat16), lw_ref[...],
                             preferred_element_type=jnp.float32) + lb_ref[...]

    return kernel


# ----------------------------------------------------------------------------
# Wrapper (glue)
# ----------------------------------------------------------------------------
_VMEM_SPEC = pl.BlockSpec(memory_space=pltpu.MemorySpace.VMEM)


def tcn_forward(x, params, *, kernel_size):
    """x: (B, num_features, seq_length) == kernel layout (B, T, C)."""
    B, L, C0 = x.shape
    inputs = [x.reshape(B * L, C0)]          # fold batch into the matmul M dim
    cfgs = []
    cin = C0
    for i, blk in enumerate(params["blocks"]):
        cout = blk["w1"].shape[-1]
        has_ds = blk["wd"] is not None
        cfgs.append({"cin": cin, "cout": cout, "d": 2 ** i, "has_ds": has_ds})
        inputs += [blk["w1"], blk["b1"].reshape(1, -1),
                   blk["w2"], blk["b2"].reshape(1, -1)]
        if has_ds:
            inputs += [blk["wd"], blk["bd"].reshape(1, -1)]
        cin = cout
    inputs += [params["lin_w"], params["lin_b"].reshape(1, -1)]
    out_features = params["lin_w"].shape[-1]

    kernel = _make_tcn_kernel(B, L, kernel_size, cfgs)
    return pl.pallas_call(
        kernel,
        out_shape=jax.ShapeDtypeStruct((B, out_features), jnp.float32),
        in_specs=[_VMEM_SPEC] * len(inputs),
        out_specs=_VMEM_SPEC,
    )(*inputs)


# ----------------------------------------------------------------------------
# Deterministic parameter init (synthetic; shapes follow the PyTorch module)
# ----------------------------------------------------------------------------
def init_params(key, input_size, output_size, num_channels, kernel_size):
    blocks, ref_blocks = [], []
    cin = input_size
    for cout in num_channels:
        key, k1, k2, k3, k4, k5, k6, k7, k8 = jax.random.split(key, 9)

        def weight_normed(kv, kg, co, ci, ks):
            # forward of weight_norm: w = g * v / ||v||  (norm over (in, k))
            v = jax.random.normal(kv, (co, ci, ks), jnp.float32) * 0.1
            g = jax.random.uniform(kg, (co,), jnp.float32,
                                   minval=0.5, maxval=1.5)
            nrm = jnp.sqrt(jnp.sum(v * v, axis=(1, 2), keepdims=True))
            return g[:, None, None] * v / nrm          # torch (Cout, Cin, K)

        def to_mxu(w_t):
            # torch (Cout, Cin, K) -> (K*Cin, Cout), bf16 once for the MXU.
            return (jnp.transpose(w_t, (2, 1, 0))
                    .reshape(-1, w_t.shape[0]).astype(jnp.bfloat16))

        w1_t = weight_normed(k1, k2, cout, cin, kernel_size)
        w2_t = weight_normed(k3, k4, cout, cout, kernel_size)
        b1 = jax.random.normal(k5, (cout,), jnp.float32) * 0.05
        b2 = jax.random.normal(k6, (cout,), jnp.float32) * 0.05

        blk = {"w1": to_mxu(w1_t), "b1": b1, "w2": to_mxu(w2_t), "b2": b2}
        rblk = {"w1": w1_t, "b1": b1, "w2": w2_t, "b2": b2}

        if cin != cout:   # downsample 1x1 conv
            wd_t = jax.random.normal(k7, (cout, cin, 1), jnp.float32) * 0.01
            bd = jax.random.normal(k8, (cout,), jnp.float32) * 0.05
            blk["wd"] = wd_t[:, :, 0].T.astype(jnp.bfloat16)
            blk["bd"] = bd
            rblk["wd"], rblk["bd"] = wd_t, bd
        else:
            blk["wd"] = blk["bd"] = None
            rblk["wd"] = rblk["bd"] = None

        blocks.append(blk)
        ref_blocks.append(rblk)
        cin = cout

    key, kl1, kl2 = jax.random.split(key, 3)
    lin_w_t = jax.random.normal(kl1, (output_size, num_channels[-1]),
                                jnp.float32) * 0.1
    lin_b = jax.random.normal(kl2, (output_size,), jnp.float32) * 0.05

    params = {"blocks": blocks,
              "lin_w": lin_w_t.T.astype(jnp.bfloat16), "lin_b": lin_b}
    ref_params = {"blocks": ref_blocks, "lin_w": lin_w_t, "lin_b": lin_b}
    return params, ref_params


# ----------------------------------------------------------------------------
# Pure-JAX reference (mirrors the PyTorch graph: pad both sides + Chomp1d).
# matmul_dtype=bf16 gives a precision-matched reference (f32 accumulate).
# ----------------------------------------------------------------------------
def ref_forward(x_bfs, ref_params, *, kernel_size, matmul_dtype=jnp.float32):
    x = jnp.transpose(x_bfs, (0, 2, 1))          # permute(0, 2, 1) -> NCL
    dn = ("NCH", "OIH", "NCH")

    def conv(x_in, w, b, d, pad):
        y = jax.lax.conv_general_dilated(
            x_in.astype(matmul_dtype), w.astype(matmul_dtype),
            window_strides=(1,), padding=[(pad, pad)],
            rhs_dilation=(d,), dimension_numbers=dn,
            preferred_element_type=jnp.float32)
        if pad > 0:
            y = y[:, :, :x_in.shape[2]]          # Chomp1d
        return y + b[None, :, None]

    for i, blk in enumerate(ref_params["blocks"]):
        d = 2 ** i
        P = (kernel_size - 1) * d
        h1 = jax.nn.relu(conv(x, blk["w1"], blk["b1"], d, P))
        h2 = jax.nn.relu(conv(h1, blk["w2"], blk["b2"], d, P))
        res = x if blk["wd"] is None else conv(x, blk["wd"], blk["bd"], 1, 0)
        x = jax.nn.relu(h2 + res)
    last = x[:, :, -1]
    return (jnp.dot(last.astype(matmul_dtype),
                    ref_params["lin_w"].T.astype(matmul_dtype),
                    preferred_element_type=jnp.float32)
            + ref_params["lin_b"])


# ----------------------------------------------------------------------------
if __name__ == "__main__":
    B = 2
    num_features = 16      # conv time axis after permute
    input_size = 8         # seq_length -> conv channels after permute
    output_size = 10
    num_channels = [16, 32]
    kernel_size = 2
    # dropout = 0.2  (identity at inference)

    key = jax.random.PRNGKey(0)
    key, kx = jax.random.split(key)
    # PyTorch TCN input: (batch_size, num_features, seq_length)
    x = jax.random.normal(kx, (B, num_features, input_size), jnp.float32)

    params, ref_params = init_params(key, input_size, output_size,
                                     num_channels, kernel_size)

    out = tcn_forward(x, params, kernel_size=kernel_size)
    out = jax.block_until_ready(out)

    # Precision-matched reference (bf16 matmul operands, f32 accumulate).
    ref_bf16 = ref_forward(x, ref_params, kernel_size=kernel_size,
                           matmul_dtype=jnp.bfloat16)
    np.testing.assert_allclose(np.asarray(out), np.asarray(ref_bf16),
                               rtol=1e-2, atol=1e-2)

    # Full-f32 reference (PyTorch semantics); looser tolerance for bf16 MXU.
    ref_f32 = ref_forward(x, ref_params, kernel_size=kernel_size)
    np.testing.assert_allclose(np.asarray(out), np.asarray(ref_f32),
                               rtol=5e-2, atol=5e-2)

    print("KERNEL_OK")
</pallas_src>

<mosaic_0001>
module attributes {stable_mosaic.version = 11 : i64} {
  func.func @kernel(%arg0: memref<32x8xf32, #tpu.memory_space<vmem>>, %arg1: memref<16x16xbf16, #tpu.memory_space<vmem>>, %arg2: memref<1x16xf32, #tpu.memory_space<vmem>>, %arg3: memref<32x16xbf16, #tpu.memory_space<vmem>>, %arg4: memref<1x16xf32, #tpu.memory_space<vmem>>, %arg5: memref<8x16xbf16, #tpu.memory_space<vmem>>, %arg6: memref<1x16xf32, #tpu.memory_space<vmem>>, %arg7: memref<32x32xbf16, #tpu.memory_space<vmem>>, %arg8: memref<1x32xf32, #tpu.memory_space<vmem>>, %arg9: memref<64x32xbf16, #tpu.memory_space<vmem>>, %arg10: memref<1x32xf32, #tpu.memory_space<vmem>>, %arg11: memref<16x32xbf16, #tpu.memory_space<vmem>>, %arg12: memref<1x32xf32, #tpu.memory_space<vmem>>, %arg13: memref<32x10xbf16, #tpu.memory_space<vmem>>, %arg14: memref<1x10xf32, #tpu.memory_space<vmem>>, %arg15: memref<2x10xf32, #tpu.memory_space<vmem>>) attributes {dimension_semantics = [], scalar_prefetch = 0 : i64, scratch_operands = 0 : i64, tpu.core_type = #tpu.core_type<tc>} {
    %0 = tpu.iota {dimensions = array<i32: 0>} : vector<32x1xi32>
    %c16_i32 = arith.constant 16 : i32
    %c0_i32 = arith.constant 0 : i32
    %1 = arith.cmpi eq, %c16_i32, %c0_i32 : i32
    %c1_i32 = arith.constant 1 : i32
    %2 = arith.select %1, %c1_i32, %c16_i32 : i32
    %3 = vector.broadcast %2 : i32 to vector<32x1xi32>
    %4 = arith.remsi %0, %3 : vector<32x1xi32>
    %c0_i32_0 = arith.constant 0 : i32
    %5 = vector.broadcast %c0_i32_0 : i32 to vector<32x1xi32>
    %6 = arith.cmpi ne, %4, %5 : vector<32x1xi32>
    %c0_i32_1 = arith.constant 0 : i32
    %7 = vector.broadcast %c0_i32_1 : i32 to vector<32x1xi32>
    %8 = arith.cmpi slt, %4, %7 : vector<32x1xi32>
    %c0_i32_2 = arith.constant 0 : i32
    %9 = arith.cmpi slt, %2, %c0_i32_2 : i32
    %10 = vector.broadcast %9 : i1 to vector<32x1xi1>
    %11 = vector.broadcast %10 : vector<32x1xi1> to vector<32x1xi1>
    %12 = arith.xori %8, %11 : vector<32x1xi1>
    %13 = arith.andi %12, %6 : vector<32x1xi1>
    %14 = vector.broadcast %2 : i32 to vector<32x1xi32>
    %15 = arith.addi %4, %14 : vector<32x1xi32>
    %16 = arith.select %13, %15, %4 : vector<32x1xi1>, vector<32x1xi32>
    %c0 = arith.constant 0 : index
    %c0_3 = arith.constant 0 : index
    %17 = vector.load %arg0[%c0, %c0_3] : memref<32x8xf32, #tpu.memory_space<vmem>>, vector<32x8xf32>
    %c1_i32_4 = arith.constant 1 : i32
    %18 = tpu.dynamic_rotate %17 by %c1_i32_4 dim 0 : vector<32x8xf32>, i32 -> vector<32x8xf32>
    %c1_i32_5 = arith.constant 1 : i32
    %19 = vector.broadcast %c1_i32_5 : i32 to vector<32x1xi32>
    %20 = arith.cmpi slt, %16, %19 : vector<32x1xi32>
    %cst = arith.constant 0.000000e+00 : f32
    %21 = vector.shape_cast %20 : vector<32x1xi1> to vector<32x1xi1>
    %22 = vector.broadcast %21 : vector<32x1xi1> to vector<32x8xi1>
    %23 = vector.broadcast %cst : f32 to vector<32x8xf32>
    %24 = arith.select %22, %23, %18 : vector<32x8xi1>, vector<32x8xf32>
    %25 = tpu.concatenate %24, %17 in 1 : vector<32x8xf32>, vector<32x8xf32> -> vector<32x16xf32>
    %26 = arith.truncf %25 : vector<32x16xf32> to vector<32x16xbf16>
    %c0_6 = arith.constant 0 : index
    %c0_7 = arith.constant 0 : index
    %27 = vector.load %arg1[%c0_6, %c0_7] : memref<16x16xbf16, #tpu.memory_space<vmem>>, vector<16x16xbf16>
    %cst_8 = arith.constant dense<0.000000e+00> : vector<32x16xf32>
    %28 = tpu.matmul %26, %27, %cst_8 {dimension_numbers = #tpu.dot_dimension_numbers<[1], [0], [0], [1], [0, 0, 1, 1], [], []>} : vector<32x16xbf16>, vector<16x16xbf16>, vector<32x16xf32> -> vector<32x16xf32>
    %c0_9 = arith.constant 0 : index
    %c0_10 = arith.constant 0 : index
    %29 = vector.load %arg2[%c0_9, %c0_10] : memref<1x16xf32, #tpu.memory_space<vmem>>, vector<1x16xf32>
    %30 = vector.broadcast %29 : vector<1x16xf32> to vector<32x16xf32>
    %31 = arith.addf %28, %30 : vector<32x16xf32>
    %cst_11 = arith.constant 0.000000e+00 : f32
    %32 = vector.broadcast %cst_11 : f32 to vector<32x16xf32>
    %33 = arith.maximumf %31, %32 : vector<32x16xf32>
    %c1_i32_12 = arith.constant 1 : i32
    %34 = tpu.dynamic_rotate %33 by %c1_i32_12 dim 0 : vector<32x16xf32>, i32 -> vector<32x16xf32>
    %c1_i32_13 = arith.constant 1 : i32
    %35 = vector.broadcast %c1_i32_13 : i32 to vector<32x1xi32>
    %36 = arith.cmpi slt, %16, %35 : vector<32x1xi32>
    %cst_14 = arith.constant 0.000000e+00 : f32
    %37 = vector.shape_cast %36 : vector<32x1xi1> to vector<32x1xi1>
    %38 = vector.broadcast %37 : vector<32x1xi1> to vector<32x16xi1>
    %39 = vector.broadcast %cst_14 : f32 to vector<32x16xf32>
    %40 = arith.select %38, %39, %34 : vector<32x16xi1>, vector<32x16xf32>
    %41 = tpu.concatenate %40, %33 in 1 : vector<32x16xf32>, vector<32x16xf32> -> vector<32x32xf32>
    %42 = arith.truncf %41 : vector<32x32xf32> to vector<32x32xbf16>
    %c0_15 = arith.constant 0 : index
    %c0_16 = arith.constant 0 : index
    %43 = vector.load %arg3[%c0_15, %c0_16] : memref<32x16xbf16, #tpu.memory_space<vmem>>, vector<32x16xbf16>
    %cst_17 = arith.constant dense<0.000000e+00> : vector<32x16xf32>
    %44 = tpu.matmul %42, %43, %cst_17 {dimension_numbers = #tpu.dot_dimension_numbers<[1], [0], [0], [1], [0, 0, 1, 1], [], []>} : vector<32x32xbf16>, vector<32x16xbf16>, vector<32x16xf32> -> vector<32x16xf32>
    %c0_18 = arith.constant 0 : index
    %c0_19 = arith.constant 0 : index
    %45 = vector.load %arg4[%c0_18, %c0_19] : memref<1x16xf32, #tpu.memory_space<vmem>>, vector<1x16xf32>
    %46 = vector.broadcast %45 : vector<1x16xf32> to vector<32x16xf32>
    %47 = arith.addf %44, %46 : vector<32x16xf32>
    %cst_20 = arith.constant 0.000000e+00 : f32
    %48 = vector.broadcast %cst_20 : f32 to vector<32x16xf32>
    %49 = arith.maximumf %47, %48 : vector<32x16xf32>
    %50 = arith.truncf %17 : vector<32x8xf32> to vector<32x8xbf16>
    %c0_21 = arith.constant 0 : index
    %c0_22 = arith.constant 0 : index
    %51 = vector.load %arg5[%c0_21, %c0_22] : memref<8x16xbf16, #tpu.memory_space<vmem>>, vector<8x16xbf16>
    %cst_23 = arith.constant dense<0.000000e+00> : vector<32x16xf32>
    %52 = tpu.matmul %50, %51, %cst_23 {dimension_numbers = #tpu.dot_dimension_numbers<[1], [0], [0], [1], [0, 0, 1, 1], [], []>} : vector<32x8xbf16>, vector<8x16xbf16>, vector<32x16xf32> -> vector<32x16xf32>
    %c0_24 = arith.constant 0 : index
    %c0_25 = arith.constant 0 : index
    %53 = vector.load %arg6[%c0_24, %c0_25] : memref<1x16xf32, #tpu.memory_space<vmem>>, vector<1x16xf32>
    %54 = vector.broadcast %53 : vector<1x16xf32> to vector<32x16xf32>
    %55 = arith.addf %52, %54 : vector<32x16xf32>
    %56 = arith.addf %49, %55 : vector<32x16xf32>
    %cst_26 = arith.constant 0.000000e+00 : f32
    %57 = vector.broadcast %cst_26 : f32 to vector<32x16xf32>
    %58 = arith.maximumf %56, %57 : vector<32x16xf32>
    %c2_i32 = arith.constant 2 : i32
    %59 = tpu.dynamic_rotate %58 by %c2_i32 dim 0 : vector<32x16xf32>, i32 -> vector<32x16xf32>
    %c2_i32_27 = arith.constant 2 : i32
    %60 = vector.broadcast %c2_i32_27 : i32 to vector<32x1xi32>
    %61 = arith.cmpi slt, %16, %60 : vector<32x1xi32>
    %cst_28 = arith.constant 0.000000e+00 : f32
    %62 = vector.shape_cast %61 : vector<32x1xi1> to vector<32x1xi1>
    %63 = vector.broadcast %62 : vector<32x1xi1> to vector<32x16xi1>
    %64 = vector.broadcast %cst_28 : f32 to vector<32x16xf32>
    %65 = arith.select %63, %64, %59 : vector<32x16xi1>, vector<32x16xf32>
    %66 = tpu.concatenate %65, %58 in 1 : vector<32x16xf32>, vector<32x16xf32> -> vector<32x32xf32>
    %67 = arith.truncf %66 : vector<32x32xf32> to vector<32x32xbf16>
    %c0_29 = arith.constant 0 : index
    %c0_30 = arith.constant 0 : index
    %68 = vector.load %arg7[%c0_29, %c0_30] : memref<32x32xbf16, #tpu.memory_space<vmem>>, vector<32x32xbf16>
    %cst_31 = arith.constant dense<0.000000e+00> : vector<32x32xf32>
    %69 = tpu.matmul %67, %68, %cst_31 {dimension_numbers = #tpu.dot_dimension_numbers<[1], [0], [0], [1], [0, 0, 1, 1], [], []>} : vector<32x32xbf16>, vector<32x32xbf16>, vector<32x32xf32> -> vector<32x32xf32>
    %c0_32 = arith.constant 0 : index
    %c0_33 = arith.constant 0 : index
    %70 = vector.load %arg8[%c0_32, %c0_33] : memref<1x32xf32, #tpu.memory_space<vmem>>, vector<1x32xf32>
    %71 = vector.broadcast %70 : vector<1x32xf32> to vector<32x32xf32>
    %72 = arith.addf %69, %71 : vector<32x32xf32>
    %cst_34 = arith.constant 0.000000e+00 : f32
    %73 = vector.broadcast %cst_34 : f32 to vector<32x32xf32>
    %74 = arith.maximumf %72, %73 : vector<32x32xf32>
    %c2_i32_35 = arith.constant 2 : i32
    %75 = tpu.dynamic_rotate %74 by %c2_i32_35 dim 0 : vector<32x32xf32>, i32 -> vector<32x32xf32>
    %c2_i32_36 = arith.constant 2 : i32
    %76 = vector.broadcast %c2_i32_36 : i32 to vector<32x1xi32>
    %77 = arith.cmpi slt, %16, %76 : vector<32x1xi32>
    %cst_37 = arith.constant 0.000000e+00 : f32
    %78 = vector.shape_cast %77 : vector<32x1xi1> to vector<32x1xi1>
    %79 = vector.broadcast %78 : vector<32x1xi1> to vector<32x32xi1>
    %80 = vector.broadcast %cst_37 : f32 to vector<32x32xf32>
    %81 = arith.select %79, %80, %75 : vector<32x32xi1>, vector<32x32xf32>
    %82 = tpu.concatenate %81, %74 in 1 : vector<32x32xf32>, vector<32x32xf32> -> vector<32x64xf32>
    %83 = arith.truncf %82 : vector<32x64xf32> to vector<32x64xbf16>
    %c0_38 = arith.constant 0 : index
    %c0_39 = arith.constant 0 : index
    %84 = vector.load %arg9[%c0_38, %c0_39] : memref<64x32xbf16, #tpu.memory_space<vmem>>, vector<64x32xbf16>
    %cst_40 = arith.constant dense<0.000000e+00> : vector<32x32xf32>
    %85 = tpu.matmul %83, %84, %cst_40 {dimension_numbers = #tpu.dot_dimension_numbers<[1], [0], [0], [1], [0, 0, 1, 1], [], []>} : vector<32x64xbf16>, vector<64x32xbf16>, vector<32x32xf32> -> vector<32x32xf32>
    %c0_41 = arith.constant 0 : index
    %c0_42 = arith.constant 0 : index
    %86 = vector.load %arg10[%c0_41, %c0_42] : memref<1x32xf32, #tpu.memory_space<vmem>>, vector<1x32xf32>
    %87 = vector.broadcast %86 : vector<1x32xf32> to vector<32x32xf32>
    %88 = arith.addf %85, %87 : vector<32x32xf32>
    %cst_43 = arith.constant 0.000000e+00 : f32
    %89 = vector.broadcast %cst_43 : f32 to vector<32x32xf32>
    %90 = arith.maximumf %88, %89 : vector<32x32xf32>
    %91 = arith.truncf %58 : vector<32x16xf32> to vector<32x16xbf16>
    %c0_44 = arith.constant 0 : index
    %c0_45 = arith.constant 0 : index
    %92 = vector.load %arg11[%c0_44, %c0_45] : memref<16x32xbf16, #tpu.memory_space<vmem>>, vector<16x32xbf16>
    %cst_46 = arith.constant dense<0.000000e+00> : vector<32x32xf32>
    %93 = tpu.matmul %91, %92, %cst_46 {dimension_numbers = #tpu.dot_dimension_numbers<[1], [0], [0], [1], [0, 0, 1, 1], [], []>} : vector<32x16xbf16>, vector<16x32xbf16>, vector<32x32xf32> -> vector<32x32xf32>
    %c0_47 = arith.constant 0 : index
    %c0_48 = arith.constant 0 : index
    %94 = vector.load %arg12[%c0_47, %c0_48] : memref<1x32xf32, #tpu.memory_space<vmem>>, vector<1x32xf32>
    %95 = vector.broadcast %94 : vector<1x32xf32> to vector<32x32xf32>
    %96 = arith.addf %93, %95 : vector<32x32xf32>
    %97 = arith.addf %90, %96 : vector<32x32xf32>
    %cst_49 = arith.constant 0.000000e+00 : f32
    %98 = vector.broadcast %cst_49 : f32 to vector<32x32xf32>
    %99 = arith.maximumf %97, %98 : vector<32x32xf32>
    %100 = vector.shape_cast %99 : vector<32x32xf32> to vector<2x16x32xf32>
    %101 = vector.extract_strided_slice %100 {offsets = [0, 15, 0], sizes = [2, 1, 32], strides = [1, 1, 1]} : vector<2x16x32xf32> to vector<2x1x32xf32>
    %102 = vector.shape_cast %101 : vector<2x1x32xf32> to vector<2x32xf32>
    %103 = arith.truncf %102 : vector<2x32xf32> to vector<2x32xbf16>
    %c0_50 = arith.constant 0 : index
    %c0_51 = arith.constant 0 : index
    %104 = vector.load %arg13[%c0_50, %c0_51] : memref<32x10xbf16, #tpu.memory_space<vmem>>, vector<32x10xbf16>
    %cst_52 = arith.constant dense<0.000000e+00> : vector<2x10xf32>
    %105 = tpu.matmul %103, %104, %cst_52 {dimension_numbers = #tpu.dot_dimension_numbers<[1], [0], [0], [1], [0, 0, 1, 1], [], []>} : vector<2x32xbf16>, vector<32x10xbf16>, vector<2x10xf32> -> vector<2x10xf32>
    %c0_53 = arith.constant 0 : index
    %c0_54 = arith.constant 0 : index
    %106 = vector.load %arg14[%c0_53, %c0_54] : memref<1x10xf32, #tpu.memory_space<vmem>>, vector<1x10xf32>
    %107 = vector.broadcast %106 : vector<1x10xf32> to vector<2x10xf32>
    %108 = arith.addf %105, %107 : vector<2x10xf32>
    %c0_55 = arith.constant 0 : index
    %c0_56 = arith.constant 0 : index
    %109 = vector.load %arg15[%c0_55, %c0_56] : memref<2x10xf32, #tpu.memory_space<vmem>>, vector<2x10xf32>
    tpu.vector_store %arg15[%c0_55, %c0_56], %108 {strides = array<i32>} : memref<2x10xf32, #tpu.memory_space<vmem>>, vector<2x10xf32>,
    return
  }
}

</mosaic_0001>

<llo_original>
// kernel: tpu_custom_call.1
$region0: #{tpu_custom_call.1}
  #allocation0 [shape = 'u32[]', space=smem, size = 0x4, offset = 0x4, fixed_abs, tag = 'smem constant byte address 0x4 - core index']
  #allocation1 [shape = 'u32[144,128]{1,0:T(1,128)}', space=vmem, size = 0x12000, scoped, tag = 'internal scratch']
  %s0 = inlined_call_operand.vmem [shape: f32[32,8], index: 0, kind: input, shape index: {}]
  %s1 = inlined_call_operand.vmem [shape: bf16[16,16], index: 1, kind: input, shape index: {}]
  %s2 = inlined_call_operand.vmem [shape: f32[1,16], index: 2, kind: input, shape index: {}]
  %s3 = inlined_call_operand.vmem [shape: bf16[32,16], index: 3, kind: input, shape index: {}]
  %s4 = inlined_call_operand.vmem [shape: f32[1,16], index: 4, kind: input, shape index: {}]
  %s5 = inlined_call_operand.vmem [shape: bf16[8,16], index: 5, kind: input, shape index: {}]
  %s6 = inlined_call_operand.vmem [shape: f32[1,16], index: 6, kind: input, shape index: {}]
  %s7 = inlined_call_operand.vmem [shape: bf16[32,32], index: 7, kind: input, shape index: {}]
  %s8 = inlined_call_operand.vmem [shape: f32[1,32], index: 8, kind: input, shape index: {}]
  %s9 = inlined_call_operand.vmem [shape: bf16[64,32], index: 9, kind: input, shape index: {}]
  %s10 = inlined_call_operand.vmem [shape: f32[1,32], index: 10, kind: input, shape index: {}]
  %s11 = inlined_call_operand.vmem [shape: bf16[16,32], index: 11, kind: input, shape index: {}]
  %s12 = inlined_call_operand.vmem [shape: f32[1,32], index: 12, kind: input, shape index: {}]
  %s13 = inlined_call_operand.vmem [shape: bf16[32,10], index: 13, kind: input, shape index: {}]
  %s14 = inlined_call_operand.vmem [shape: f32[1,10], index: 14, kind: input, shape index: {}]
  %s15 = inlined_call_operand.hbm [shape: f32[2,10], index: 15, kind: output, shape index: {}]
  %s16 = sld [smem:[#allocation0]]
  $region70: #{tpu_custom_call.1} parent=0
    _
  %s18 = ssub.s32 1, %s16
  %s19 = scalar_select 0, %s18, %s16
  $region1: #{tpu_custom_call.1} parent=0
    #allocation2 [shape = 'u8[1024]{0}', space=vmem, size = 0x400, scoped, tag = 'output window, operand 0, single buffered']
    #allocation3 [shape = 's32[1]{0}', space=sflag, size = 0x4, scoped, tag = 'scoped memory for tpu_custom_call.1']
    %20 = vsyncpa [#allocation3], 0
    // Predicated region
    $region2: #{tpu_custom_call.1} parent=1 // pred_check
      _
    $region3: #{tpu_custom_call.1} parent=1 // pred_check_branch
      %22 = sbr.rel (0) target = $region5
    $region4: #{tpu_custom_call.1} parent=1 // pred_region
      _
    $region5: #{tpu_custom_call.1} parent=1 // pred_fallthru
      _
    // Predicated region
    $region6: #{tpu_custom_call.1} parent=1 // pred_check
      _
    $region7: #{tpu_custom_call.1} parent=1 // pred_check_branch
      %24 = sbr.rel (0) target = $region9
    $region8: #{tpu_custom_call.1} parent=1 // pred_region
      _
    $region9: #{tpu_custom_call.1} parent=1 // pred_fallthru
      _
    // Predicated region
    $region10: #{tpu_custom_call.1} parent=1 // pred_check
      _
    $region11: #{tpu_custom_call.1} parent=1 // pred_check_branch
      %26 = sbr.rel (0) target = $region13
    $region12: #{tpu_custom_call.1} parent=1 // pred_region
      _
    $region13: #{tpu_custom_call.1} parent=1 // pred_fallthru
      _
    // Predicated region
    $region14: #{tpu_custom_call.1} parent=1 // pred_check
      _
    $region15: #{tpu_custom_call.1} parent=1 // pred_check_branch
      %28 = sbr.rel (0) target = $region17
    $region16: #{tpu_custom_call.1} parent=1 // pred_region
      _
    $region17: #{tpu_custom_call.1} parent=1 // pred_fallthru
      _
    // Predicated region
    $region18: #{tpu_custom_call.1} parent=1 // pred_check
      _
    $region19: #{tpu_custom_call.1} parent=1 // pred_check_branch
      %30 = sbr.rel (0) target = $region21
    $region20: #{tpu_custom_call.1} parent=1 // pred_region
      _
    $region21: #{tpu_custom_call.1} parent=1 // pred_fallthru
      _
    // Predicated region
    $region22: #{tpu_custom_call.1} parent=1 // pred_check
      _
    $region23: #{tpu_custom_call.1} parent=1 // pred_check_branch
      %32 = sbr.rel (0) target = $region25
    $region24: #{tpu_custom_call.1} parent=1 // pred_region
      _
    $region25: #{tpu_custom_call.1} parent=1 // pred_fallthru
      _
    // Predicated region
    $region26: #{tpu_custom_call.1} parent=1 // pred_check
      _
    $region27: #{tpu_custom_call.1} parent=1 // pred_check_branch
      %34 = sbr.rel (0) target = $region29
    $region28: #{tpu_custom_call.1} parent=1 // pred_region
      _
    $region29: #{tpu_custom_call.1} parent=1 // pred_fallthru
      _
    // Predicated region
    $region30: #{tpu_custom_call.1} parent=1 // pred_check
      _
    $region31: #{tpu_custom_call.1} parent=1 // pred_check_branch
      %36 = sbr.rel (0) target = $region33
    $region32: #{tpu_custom_call.1} parent=1 // pred_region
      _
    $region33: #{tpu_custom_call.1} parent=1 // pred_fallthru
      _
    // Predicated region
    $region34: #{tpu_custom_call.1} parent=1 // pred_check
      _
    $region35: #{tpu_custom_call.1} parent=1 // pred_check_branch
      %38 = sbr.rel (0) target = $region37
    $region36: #{tpu_custom_call.1} parent=1 // pred_region
      _
    $region37: #{tpu_custom_call.1} parent=1 // pred_fallthru
      _
    // Predicated region
    $region38: #{tpu_custom_call.1} parent=1 // pred_check
      _
    $region39: #{tpu_custom_call.1} parent=1 // pred_check_branch
      %40 = sbr.rel (0) target = $region41
    $region40: #{tpu_custom_call.1} parent=1 // pred_region
      _
    $region41: #{tpu_custom_call.1} parent=1 // pred_fallthru
      _
    // Predicated region
    $region42: #{tpu_custom_call.1} parent=1 // pred_check
      _
    $region43: #{tpu_custom_call.1} parent=1 // pred_check_branch
      %42 = sbr.rel (0) target = $region45
    $region44: #{tpu_custom_call.1} parent=1 // pred_region
      _
    $region45: #{tpu_custom_call.1} parent=1 // pred_fallthru
      _
    // Predicated region
    $region46: #{tpu_custom_call.1} parent=1 // pred_check
      _
    $region47: #{tpu_custom_call.1} parent=1 // pred_check_branch
      %44 = sbr.rel (0) target = $region49
    $region48: #{tpu_custom_call.1} parent=1 // pred_region
      _
    $region49: #{tpu_custom_call.1} parent=1 // pred_fallthru
      _
    // Predicated region
    $region50: #{tpu_custom_call.1} parent=1 // pred_check
      _
    $region51: #{tpu_custom_call.1} parent=1 // pred_check_branch
      %46 = sbr.rel (0) target = $region53
    $region52: #{tpu_custom_call.1} parent=1 // pred_region
      _
    $region53: #{tpu_custom_call.1} parent=1 // pred_fallthru
      _
    // Predicated region
    $region54: #{tpu_custom_call.1} parent=1 // pred_check
      _
    $region55: #{tpu_custom_call.1} parent=1 // pred_check_branch
      %48 = sbr.rel (0) target = $region57
    $region56: #{tpu_custom_call.1} parent=1 // pred_region
      _
    $region57: #{tpu_custom_call.1} parent=1 // pred_fallthru
      _
    // Predicated region
    $region58: #{tpu_custom_call.1} parent=1 // pred_check
      _
    $region59: #{tpu_custom_call.1} parent=1 // pred_check_branch
      %50 = sbr.rel (0) target = $region61
    $region60: #{tpu_custom_call.1} parent=1 // pred_region
      _
    $region61: #{tpu_custom_call.1} parent=1 // pred_fallthru
      _
    %v52 = vlaneseq
    %v53 = vshrl.u32 %v52, 7
    %v54 = vadd.s32 %v53, 8
    %v55 = vadd.s32 %v53, 16
    %v56 = vadd.s32 %v53, 24
    %vm57 = vcmp.lt.s32.totalorder %v53, 0
    %v58 = vsub.s32 0, %v53
    %v59 = vsel %vm57, %v58, %v53
    %v60 = vshrl.u32 %v59, 4
    %v61 = vand.u32 %v59, 15
    %v62 = vsub.s32 0, %v61
    %v63 = vsel %vm57, %v62, %v61
    %vm64 = vcmp.lt.s32.totalorder %v54, 0
    %v65 = vsub.s32 0, %v54
    %v66 = vsel %vm64, %v65, %v54
    %v67 = vshrl.u32 %v66, 4
    %v68 = vand.u32 %v66, 15
    %v69 = vsub.s32 0, %v68
    %v70 = vsel %vm64, %v69, %v68
    %vm71 = vcmp.lt.s32.totalorder %v55, 0
    %v72 = vsub.s32 0, %v55
    %v73 = vsel %vm71, %v72, %v55
    %v74 = vshrl.u32 %v73, 4
    %v75 = vand.u32 %v73, 15
    %v76 = vsub.s32 0, %v75
    %v77 = vsel %vm71, %v76, %v75
    %vm78 = vcmp.lt.s32.totalorder %v56, 0
    %v79 = vsub.s32 0, %v56
    %v80 = vsel %vm78, %v79, %v56
    %v81 = vshrl.u32 %v80, 4
    %v82 = vand.u32 %v80, 15
    %v83 = vsub.s32 0, %v82
    %v84 = vsel %vm78, %v83, %v82
    %vm85 = vcmp.ne.s32.totalorder %v63, 0
    %vm86 = vcmp.ne.s32.totalorder %v70, 0
    %vm87 = vcmp.ne.s32.totalorder %v77, 0
    %vm88 = vcmp.ne.s32.totalorder %v84, 0
    %vm89 = vcmp.lt.s32.totalorder %v63, 0
    %vm90 = vcmp.lt.s32.totalorder %v70, 0
    %vm91 = vcmp.lt.s32.totalorder %v77, 0
    %vm92 = vcmp.lt.s32.totalorder %v84, 0
    %vm93 = vmand %vm89, %vm85
    %vm94 = vmand %vm90, %vm86
    %vm95 = vmand %vm91, %vm87
    %vm96 = vmand %vm92, %vm88
    %v97 = vadd.s32 %v63, 16
    %v98 = vadd.s32 %v70, 16
    %v99 = vadd.s32 %v77, 16
    %v100 = vadd.s32 %v84, 16
    %v101 = vsel %vm93, %v97, %v63
    %v102 = vsel %vm94, %v98, %v70
    %v103 = vsel %vm95, %v99, %v77
    %v104 = vsel %vm96, %v100, %v84
    %v105 = vld [vmem:[%s0] sm:$0xff]
    %v106 = vld [vmem:[%s0 + $0x8] sm:$0xff]
    %v107 = vld [vmem:[%s0 + $0x10] sm:$0xff]
    %v108 = vld [vmem:[%s0 + $0x18] sm:$0xff]
    %v109 = vrot.slane %v105, 7
    %v110 = vrot.slane %v106, 7
    %v111 = vrot.slane %v107, 7
    %v112 = vrot.slane %v108, 7
    %vm113 = vcmp.lt.s32.totalorder %v53, 1
    %v114 = vsel %vm113, %v111, %v112
    %v115 = vsel %vm113, %v110, %v111
    %v116 = vsel %vm113, %v109, %v110
    %v117 = vsel %vm113, %v112, %v109
    %vm118 = vcmp.lt.s32.totalorder %v101, 1
    %vm119 = vcmp.lt.s32.totalorder %v102, 1
    %vm120 = vcmp.lt.s32.totalorder %v103, 1
    %vm121 = vcmp.lt.s32.totalorder %v104, 1
    %v122 = vsel %vm118, 1, 0
    %v123 = vsel %vm119, 1, 0
    %v124 = vsel %vm120, 1, 0
    %v125 = vsel %vm121, 1, 0
    %vm126 = vcmp.eq.s32.totalorder %v122, 1
    %vm127 = vcmp.eq.s32.totalorder %v123, 1
    %vm128 = vcmp.eq.s32.totalorder %v124, 1
    %vm129 = vcmp.eq.s32.totalorder %v125, 1
    %v130 = vsel %vm126, 0.0, %v117
    %v131 = vsel %vm127, 0.0, %v116
    %v132 = vsel %vm128, 0.0, %v115
    %v133 = vsel %vm129, 0.0, %v114
    %138 = vrot.lane.b32.xlu0 %v105, 8
    %v139 = vpop.permute.xlu0 %138
    %140 = vrot.lane.b32.xlu0 %v106, 8
    %v141 = vpop.permute.xlu0 %140
    %142 = vrot.lane.b32.xlu0 %v107, 8
    %v143 = vpop.permute.xlu0 %142
    %144 = vrot.lane.b32.xlu0 %v108, 8
    %v145 = vpop.permute.xlu0 %144
    %vm150 = vcmask 64512
    %v151 = vsel %vm150, %v130, %v139
    %v152 = vsel %vm150, %v131, %v141
    %v153 = vsel %vm150, %v132, %v143
    %v154 = vsel %vm150, %v133, %v145
    %v155 = vpack.c.bf16 %v152, %v151
    %v156 = vpack.c.bf16 %v154, %v153
    %v157 = vld [vmem:[%s1] sm:$0xf]
    %v158 = vld [vmem:[%s1 + $0x4] sm:$0xf]
    %v159 = vld [vmem:[%s2] sm:$0x1]
    %v161 = vlaneseq
    %v162 = vshrl.u32 %v161, 7
    %v163 = vsub.s32 0, %v162
    %v164 = vrot.slane %v159, %v163
    %v168 = vunpack.c.l.b16 %v157
    %v169 = vunpack.c.l.b16 %v158
    %v170 = vpack.c.b16 %v169, %v168
    %vm172 = vcmask 130048
    %v174 = vsel %vm172, %v155, 0
    %v177 = vsel %vm172, %v156, 0
    %179 = vmatprep.subr.bf16.mxu0 0
    %180 = vmatpush1.bf16.msra.mxu0 0
    %181 = vmatprep.subr.bf16.mxu0 0
    %182 = vmatpush1.bf16.msra.mxu0 0
    %183 = vmatprep.subr.bf16.mxu0 0
    %184 = vmatpush1.bf16.msra.mxu0 0
    %185 = vmatprep.subr.bf16.mxu0 0
    %186 = vmatpush1.bf16.msra.mxu0 0
    %187 = vmatprep.subr.bf16.mxu0 0
    %188 = vmatpush1.bf16.msra.mxu0 0
    %189 = vmatprep.subr.bf16.mxu0 0
    %190 = vmatpush1.bf16.msra.mxu0 0
    %191 = vmatprep.subr.bf16.mxu0 0
    %192 = vmatpush1.bf16.msra.mxu0 0
    %193 = vmatprep.subr.bf16.mxu0 0
    %194 = vmatpush1.bf16.msra.mxu0 %v170
    %195 = vmatprep.subr.bf16.mxu0 0
    %196 = vmatpush2.bf16.msra.mxu0 0
    %197 = vmatprep.subr.bf16.mxu0 0
    %198 = vmatpush2.bf16.msra.mxu0 0
    %199 = vmatprep.subr.bf16.mxu0 0
    %200 = vmatpush2.bf16.msra.mxu0 0
    %201 = vmatprep.subr.bf16.mxu0 0
    %202 = vmatpush2.bf16.msra.mxu0 0
    %203 = vmatprep.subr.bf16.mxu0 0
    %204 = vmatpush2.bf16.msra.mxu0 0
    %205 = vmatprep.subr.bf16.mxu0 0
    %206 = vmatpush2.bf16.msra.mxu0 0
    %207 = vmatprep.subr.bf16.mxu0 0
    %208 = vmatpush2.bf16.msra.mxu0 0
    %209 = vmatprep.subr.bf16.mxu0 0
    %210 = vmatpush2.bf16.msra.mxu0 0
    %211 = vmatprep.mubr.bf16.mxu0 0
    %212 = vmatmul.mubr.bf16.gmra.mxu0 %v174
    %v213 = vpop.f32.mrf.mxu0
    %v214 = vadd.f32 %v164, %v213
    %v215 = vpop.f32.mrf.mxu0
    %v216 = vpop.f32.mrf.mxu0
    %v217 = vadd.f32 %v164, %v216
    %v218 = vpop.f32.mrf.mxu0
    %219 = vmatprep.mubr.bf16.mxu0 0
    %220 = vmatmul.mubr.bf16.gmra.mxu0 %v177
    %v221 = vpop.f32.mrf.mxu0
    %v222 = vadd.f32 %v164, %v221
    %v223 = vpop.f32.mrf.mxu0
    %v224 = vpop.f32.mrf.mxu0
    %v225 = vadd.f32 %v164, %v224
    %v226 = vpop.f32.mrf.mxu0
    %227 = vdwg.mxu0
    %v228 = vmax.f32 %v214, 0.0
    %v229 = vmax.f32 %v217, 0.0
    %v230 = vmax.f32 %v222, 0.0
    %v231 = vmax.f32 %v225, 0.0
    %v232 = vrot.slane %v228, 7
    %v233 = vrot.slane %v229, 7
    %v234 = vrot.slane %v230, 7
    %v235 = vrot.slane %v231, 7
    %v236 = vsel %vm113, %v234, %v235
    %v237 = vsel %vm113, %v233, %v234
    %v238 = vsel %vm113, %v232, %v233
    %v239 = vsel %vm113, %v235, %v232
    %v240 = vsel %vm126, 0.0, %v239
    %v241 = vsel %vm127, 0.0, %v238
    %v242 = vsel %vm128, 0.0, %v237
    %v243 = vsel %vm129, 0.0, %v236
    %248 = vrot.lane.b32.xlu0 %v228, 16
    %v249 = vpop.permute.xlu0 %248
    %250 = vrot.lane.b32.xlu0 %v229, 16
    %v251 = vpop.permute.xlu0 %250
    %252 = vrot.lane.b32.xlu0 %v230, 16
    %v253 = vpop.permute.xlu0 %252
    %254 = vrot.lane.b32.xlu0 %v231, 16
    %v255 = vpop.permute.xlu0 %254
    %v260 = vsel %vm172, %v240, %v249
    %v261 = vsel %vm172, %v241, %v251
    %v262 = vsel %vm172, %v242, %v253
    %v263 = vsel %vm172, %v243, %v255
    %v264 = vpack.c.bf16 %v261, %v260
    %v265 = vpack.c.bf16 %v263, %v262
    %v266 = vld [vmem:[%s3] sm:$0xf]
    %v267 = vld [vmem:[%s3 + $0x4] sm:$0xf]
    %v268 = vld [vmem:[%s3 + $0x8] sm:$0xf]
    %v269 = vld [vmem:[%s3 + $0xc] sm:$0xf]
    %v270 = vld [vmem:[%s4] sm:$0x1]
    %v272 = vlaneseq
    %v273 = vshrl.u32 %v272, 7
    %v274 = vsub.s32 0, %v273
    %v275 = vrot.slane %v270, %v274
    %v281 = vunpack.c.l.b16 %v266
    %v282 = vunpack.c.l.b16 %v267
    %v283 = vunpack.c.l.b16 %v268
    %v284 = vunpack.c.l.b16 %v269
    %v285 = vpack.c.b16 %v282, %v281
    %v286 = vpack.c.b16 %v284, %v283
    %vm289 = vcmask 261120
    %v291 = vsel %vm289, %v264, 0
    %v294 = vsel %vm289, %v265, 0
    %296 = vmatprep.subr.bf16.mxu0 0
    %297 = vmatpush1.bf16.msra.mxu0 0
    %298 = vmatprep.subr.bf16.mxu0 0
    %299 = vmatpush1.bf16.msra.mxu0 0
    %300 = vmatprep.subr.bf16.mxu0 0
    %301 = vmatpush1.bf16.msra.mxu0 0
    %302 = vmatprep.subr.bf16.mxu0 0
    %303 = vmatpush1.bf16.msra.mxu0 0
    %304 = vmatprep.subr.bf16.mxu0 0
    %305 = vmatpush1.bf16.msra.mxu0 0
    %306 = vmatprep.subr.bf16.mxu0 0
    %307 = vmatpush1.bf16.msra.mxu0 0
    %308 = vmatprep.subr.bf16.mxu0 0
    %309 = vmatpush1.bf16.msra.mxu0 %v286
    %310 = vmatprep.subr.bf16.mxu0 0
    %311 = vmatpush1.bf16.msra.mxu0 %v285
    %312 = vmatprep.subr.bf16.mxu0 0
    %313 = vmatpush2.bf16.msra.mxu0 0
    %314 = vmatprep.subr.bf16.mxu0 0
    %315 = vmatpush2.bf16.msra.mxu0 0
    %316 = vmatprep.subr.bf16.mxu0 0
    %317 = vmatpush2.bf16.msra.mxu0 0
    %318 = vmatprep.subr.bf16.mxu0 0
    %319 = vmatpush2.bf16.msra.mxu0 0
    %320 = vmatprep.subr.bf16.mxu0 0
    %321 = vmatpush2.bf16.msra.mxu0 0
    %322 = vmatprep.subr.bf16.mxu0 0
    %323 = vmatpush2.bf16.msra.mxu0 0
    %324 = vmatprep.subr.bf16.mxu0 0
    %325 = vmatpush2.bf16.msra.mxu0 0
    %326 = vmatprep.subr.bf16.mxu0 0
    %327 = vmatpush2.bf16.msra.mxu0 0
    %328 = vmatprep.mubr.bf16.mxu0 0
    %329 = vmatmul.mubr.bf16.gmra.mxu0 %v291
    %v330 = vpop.f32.mrf.mxu0
    %v331 = vadd.f32 %v275, %v330
    %v332 = vpop.f32.mrf.mxu0
    %v333 = vpop.f32.mrf.mxu0
    %v334 = vadd.f32 %v275, %v333
    %v335 = vpop.f32.mrf.mxu0
    %336 = vmatprep.mubr.bf16.mxu0 0
    %337 = vmatmul.mubr.bf16.gmra.mxu0 %v294
    %v338 = vpop.f32.mrf.mxu0
    %v339 = vadd.f32 %v275, %v338
    %v340 = vpop.f32.mrf.mxu0
    %v341 = vpop.f32.mrf.mxu0
    %v342 = vadd.f32 %v275, %v341
    %v343 = vpop.f32.mrf.mxu0
    %344 = vdwg.mxu0
    %v345 = vmax.f32 %v331, 0.0
    %v346 = vmax.f32 %v334, 0.0
    %v347 = vmax.f32 %v339, 0.0
    %v348 = vmax.f32 %v342, 0.0
    %v349 = vpack.c.bf16 %v106, %v105
    %v350 = vpack.c.bf16 %v108, %v107
    %v351 = vld [vmem:[%s5] sm:$0xf]
    %v352 = vld [vmem:[%s6] sm:$0x1]
    %v354 = vlaneseq
    %v355 = vshrl.u32 %v354, 7
    %v356 = vsub.s32 0, %v355
    %v357 = vrot.slane %v352, %v356
    %v360 = vsel %vm150, %v349, 0
    %v363 = vsel %vm150, %v350, 0
    %vm365 = vcmask 1043456
    %v367 = vsel %vm365, %v351, 0
    %369 = vmatprep.subr.bf16.mxu0 0
    %370 = vmatpush1.bf16.msra.mxu0 0
    %371 = vmatprep.subr.bf16.mxu0 0
    %372 = vmatpush1.bf16.msra.mxu0 0
    %373 = vmatprep.subr.bf16.mxu0 0
    %374 = vmatpush1.bf16.msra.mxu0 0
    %375 = vmatprep.subr.bf16.mxu0 0
    %376 = vmatpush1.bf16.msra.mxu0 0
    %377 = vmatprep.subr.bf16.mxu0 0
    %378 = vmatpush1.bf16.msra.mxu0 0
    %379 = vmatprep.subr.bf16.mxu0 0
    %380 = vmatpush1.bf16.msra.mxu0 0
    %381 = vmatprep.subr.bf16.mxu0 0
    %382 = vmatpush1.bf16.msra.mxu0 0
    %383 = vmatprep.subr.bf16.mxu0 0
    %384 = vmatpush1.bf16.msra.mxu0 %v367
    %385 = vmatprep.subr.bf16.mxu0 0
    %386 = vmatpush2.bf16.msra.mxu0 0
    %387 = vmatprep.subr.bf16.mxu0 0
    %388 = vmatpush2.bf16.msra.mxu0 0
    %389 = vmatprep.subr.bf16.mxu0 0
    %390 = vmatpush2.bf16.msra.mxu0 0
    %391 = vmatprep.subr.bf16.mxu0 0
    %392 = vmatpush2.bf16.msra.mxu0 0
    %393 = vmatprep.subr.bf16.mxu0 0
    %394 = vmatpush2.bf16.msra.mxu0 0
    %395 = vmatprep.subr.bf16.mxu0 0
    %396 = vmatpush2.bf16.msra.mxu0 0
    %397 = vmatprep.subr.bf16.mxu0 0
    %398 = vmatpush2.bf16.msra.mxu0 0
    %399 = vmatprep.subr.bf16.mxu0 0
    %400 = vmatpush2.bf16.msra.mxu0 0
    %401 = vmatprep.mubr.bf16.mxu0 0
    %402 = vmatmul.mubr.bf16.gmra.mxu0 %v360
    %v403 = vpop.f32.mrf.mxu0
    %v404 = vadd.f32 %v357, %v403
    %v405 = vpop.f32.mrf.mxu0
    %v406 = vpop.f32.mrf.mxu0
    %v407 = vadd.f32 %v357, %v406
    %v408 = vpop.f32.mrf.mxu0
    %409 = vmatprep.mubr.bf16.mxu0 0
    %410 = vmatmul.mubr.bf16.gmra.mxu0 %v363
    %v411 = vpop.f32.mrf.mxu0
    %v412 = vadd.f32 %v357, %v411
    %v413 = vpop.f32.mrf.mxu0
    %v414 = vpop.f32.mrf.mxu0
    %v415 = vadd.f32 %v357, %v414
    %v416 = vpop.f32.mrf.mxu0
    %417 = vdwg.mxu0
    %v418 = vadd.f32 %v345, %v404
    %v419 = vadd.f32 %v346, %v407
    %v420 = vadd.f32 %v347, %v412
    %v421 = vadd.f32 %v348, %v415
    %v422 = vmax.f32 %v418, 0.0
    %v423 = vmax.f32 %v419, 0.0
    %v424 = vmax.f32 %v420, 0.0
    %v425 = vmax.f32 %v421, 0.0
    %v426 = vrot.slane %v422, 6
    %v427 = vrot.slane %v423, 6
    %v428 = vrot.slane %v424, 6
    %v429 = vrot.slane %v425, 6
    %vm430 = vcmp.lt.s32.totalorder %v53, 2
    %v431 = vsel %vm430, %v428, %v429
    %v432 = vsel %vm430, %v427, %v428
    %v433 = vsel %vm430, %v426, %v427
    %v434 = vsel %vm430, %v429, %v426
    %vm435 = vcmp.lt.s32.totalorder %v101, 2
    %vm436 = vcmp.lt.s32.totalorder %v102, 2
    %vm437 = vcmp.lt.s32.totalorder %v103, 2
    %vm438 = vcmp.lt.s32.totalorder %v104, 2
    %v439 = vsel %vm435, 1, 0
    %v440 = vsel %vm436, 1, 0
    %v441 = vsel %vm437, 1, 0
    %v442 = vsel %vm438, 1, 0
    %vm443 = vcmp.eq.s32.totalorder %v439, 1
    %vm444 = vcmp.eq.s32.totalorder %v440, 1
    %vm445 = vcmp.eq.s32.totalorder %v441, 1
    %vm446 = vcmp.eq.s32.totalorder %v442, 1
    %v447 = vsel %vm443, 0.0, %v434
    %v448 = vsel %vm444, 0.0, %v433
    %v449 = vsel %vm445, 0.0, %v432
    %v450 = vsel %vm446, 0.0, %v431
    %455 = vrot.lane.b32.xlu0 %v422, 16
    %v456 = vpop.permute.xlu0 %455
    %457 = vrot.lane.b32.xlu0 %v423, 16
    %v458 = vpop.permute.xlu0 %457
    %459 = vrot.lane.b32.xlu0 %v424, 16
    %v460 = vpop.permute.xlu0 %459
    %461 = vrot.lane.b32.xlu0 %v425, 16
    %v462 = vpop.permute.xlu0 %461
    %v467 = vsel %vm172, %v447, %v456
    %v468 = vsel %vm172, %v448, %v458
    %v469 = vsel %vm172, %v449, %v460
    %v470 = vsel %vm172, %v450, %v462
    %v471 = vpack.c.bf16 %v468, %v467
    %v472 = vpack.c.bf16 %v470, %v469
    %v473 = vld [vmem:[%s7] sm:$0xf]
    %v474 = vld [vmem:[%s7 + $0x4] sm:$0xf]
    %v475 = vld [vmem:[%s7 + $0x8] sm:$0xf]
    %v476 = vld [vmem:[%s7 + $0xc] sm:$0xf]
    %v477 = vld [vmem:[%s8] sm:$0x1]
    %v479 = vlaneseq
    %v480 = vshrl.u32 %v479, 7
    %v481 = vsub.s32 0, %v480
    %v482 = vrot.slane %v477, %v481
    %v488 = vunpack.c.l.b16 %v473
    %v489 = vunpack.c.l.b16 %v474
    %v490 = vunpack.c.l.b16 %v475
    %v491 = vunpack.c.l.b16 %v476
    %v492 = vpack.c.b16 %v489, %v488
    %v493 = vpack.c.b16 %v491, %v490
    %v497 = vsel %vm289, %v471, 0
    %v500 = vsel %vm289, %v472, 0
    %502 = vmatprep.subr.bf16.mxu0 0
    %503 = vmatpush1.bf16.msra.mxu0 0
    %504 = vmatprep.subr.bf16.mxu0 0
    %505 = vmatpush1.bf16.msra.mxu0 0
    %506 = vmatprep.subr.bf16.mxu0 0
    %507 = vmatpush1.bf16.msra.mxu0 0
    %508 = vmatprep.subr.bf16.mxu0 0
    %509 = vmatpush1.bf16.msra.mxu0 0
    %510 = vmatprep.subr.bf16.mxu0 0
    %511 = vmatpush1.bf16.msra.mxu0 0
    %512 = vmatprep.subr.bf16.mxu0 0
    %513 = vmatpush1.bf16.msra.mxu0 0
    %514 = vmatprep.subr.bf16.mxu0 0
    %515 = vmatpush1.bf16.msra.mxu0 %v493
    %516 = vmatprep.subr.bf16.mxu0 0
    %517 = vmatpush1.bf16.msra.mxu0 %v492
    %518 = vmatprep.subr.bf16.mxu0 0
    %519 = vmatpush2.bf16.msra.mxu0 0
    %520 = vmatprep.subr.bf16.mxu0 0
    %521 = vmatpush2.bf16.msra.mxu0 0
    %522 = vmatprep.subr.bf16.mxu0 0
    %523 = vmatpush2.bf16.msra.mxu0 0
    %524 = vmatprep.subr.bf16.mxu0 0
    %525 = vmatpush2.bf16.msra.mxu0 0
    %526 = vmatprep.subr.bf16.mxu0 0
    %527 = vmatpush2.bf16.msra.mxu0 0
    %528 = vmatprep.subr.bf16.mxu0 0
    %529 = vmatpush2.bf16.msra.mxu0 0
    %530 = vmatprep.subr.bf16.mxu0 0
    %531 = vmatpush2.bf16.msra.mxu0 0
    %532 = vmatprep.subr.bf16.mxu0 0
    %533 = vmatpush2.bf16.msra.mxu0 0
    %534 = vmatprep.mubr.bf16.mxu0 0
    %535 = vmatmul.mubr.bf16.gmra.mxu0 %v497
    %v536 = vpop.f32.mrf.mxu0
    %v537 = vadd.f32 %v482, %v536
    %v538 = vpop.f32.mrf.mxu0
    %v539 = vpop.f32.mrf.mxu0
    %v540 = vadd.f32 %v482, %v539
    %v541 = vpop.f32.mrf.mxu0
    %542 = vmatprep.mubr.bf16.mxu0 0
    %543 = vmatmul.mubr.bf16.gmra.mxu0 %v500
    %v544 = vpop.f32.mrf.mxu0
    %v545 = vadd.f32 %v482, %v544
    %v546 = vpop.f32.mrf.mxu0
    %v547 = vpop.f32.mrf.mxu0
    %v548 = vadd.f32 %v482, %v547
    %v549 = vpop.f32.mrf.mxu0
    %550 = vdwg.mxu0
    %v551 = vmax.f32 %v537, 0.0
    %v552 = vmax.f32 %v540, 0.0
    %v553 = vmax.f32 %v545, 0.0
    %v554 = vmax.f32 %v548, 0.0
    %v555 = vrot.slane %v551, 6
    %v556 = vrot.slane %v552, 6
    %v557 = vrot.slane %v553, 6
    %v558 = vrot.slane %v554, 6
    %v559 = vsel %vm430, %v557, %v558
    %v560 = vsel %vm430, %v556, %v557
    %v561 = vsel %vm430, %v555, %v556
    %v562 = vsel %vm430, %v558, %v555
    %v563 = vsel %vm443, 0.0, %v562
    %v564 = vsel %vm444, 0.0, %v561
    %v565 = vsel %vm445, 0.0, %v560
    %v566 = vsel %vm446, 0.0, %v559
    %571 = vrot.lane.b32.xlu0 %v551, 32
    %v572 = vpop.permute.xlu0 %571
    %573 = vrot.lane.b32.xlu0 %v552, 32
    %v574 = vpop.permute.xlu0 %573
    %575 = vrot.lane.b32.xlu0 %v553, 32
    %v576 = vpop.permute.xlu0 %575
    %577 = vrot.lane.b32.xlu0 %v554, 32
    %v578 = vpop.permute.xlu0 %577
    %v583 = vsel %vm289, %v563, %v572
    %v584 = vsel %vm289, %v564, %v574
    %v585 = vsel %vm289, %v565, %v576
    %v586 = vsel %vm289, %v566, %v578
    %v587 = vpack.c.bf16 %v584, %v583
    %v588 = vpack.c.bf16 %v586, %v585
    %v589 = vld [vmem:[%s9] sm:$0xf]
    %v590 = vld [vmem:[%s9 + $0x4] sm:$0xf]
    %v591 = vld [vmem:[%s9 + $0x8] sm:$0xf]
    %v592 = vld [vmem:[%s9 + $0xc] sm:$0xf]
    %v593 = vld [vmem:[%s9 + $0x10] sm:$0xf]
    %v594 = vld [vmem:[%s9 + $0x14] sm:$0xf]
    %v595 = vld [vmem:[%s9 + $0x18] sm:$0xf]
    %v596 = vld [vmem:[%s9 + $0x1c] sm:$0xf]
    %v597 = vld [vmem:[%s10] sm:$0x1]
    %v599 = vlaneseq
    %v600 = vshrl.u32 %v599, 7
    %v601 = vsub.s32 0, %v600
    %v602 = vrot.slane %v597, %v601
    %v612 = vunpack.c.l.b16 %v589
    %v613 = vunpack.c.l.b16 %v590
    %v614 = vunpack.c.l.b16 %v591
    %v615 = vunpack.c.l.b16 %v592
    %v616 = vunpack.c.l.b16 %v593
    %v617 = vunpack.c.l.b16 %v594
    %v618 = vunpack.c.l.b16 %v595
    %v619 = vunpack.c.l.b16 %v596
    %v620 = vpack.c.b16 %v613, %v612
    %v621 = vpack.c.b16 %v615, %v614
    %v622 = vpack.c.b16 %v617, %v616
    %v623 = vpack.c.b16 %v619, %v618
    %vm628 = vcmask 523264
    %v630 = vsel %vm628, %v587, 0
    %v633 = vsel %vm628, %v588, 0
    %635 = vmatprep.subr.bf16.mxu0 0
    %636 = vmatpush1.bf16.msra.mxu0 0
    %637 = vmatprep.subr.bf16.mxu0 0
    %638 = vmatpush1.bf16.msra.mxu0 0
    %639 = vmatprep.subr.bf16.mxu0 0
    %640 = vmatpush1.bf16.msra.mxu0 0
    %641 = vmatprep.subr.bf16.mxu0 0
    %642 = vmatpush1.bf16.msra.mxu0 0
    %643 = vmatprep.subr.bf16.mxu0 0
    %644 = vmatpush1.bf16.msra.mxu0 %v623
    %645 = vmatprep.subr.bf16.mxu0 0
    %646 = vmatpush1.bf16.msra.mxu0 %v622
    %647 = vmatprep.subr.bf16.mxu0 0
    %648 = vmatpush1.bf16.msra.mxu0 %v621
    %649 = vmatprep.subr.bf16.mxu0 0
    %650 = vmatpush1.bf16.msra.mxu0 %v620
    %651 = vmatprep.subr.bf16.mxu0 0
    %652 = vmatpush2.bf16.msra.mxu0 0
    %653 = vmatprep.subr.bf16.mxu0 0
    %654 = vmatpush2.bf16.msra.mxu0 0
    %655 = vmatprep.subr.bf16.mxu0 0
    %656 = vmatpush2.bf16.msra.mxu0 0
    %657 = vmatprep.subr.bf16.mxu0 0
    %658 = vmatpush2.bf16.msra.mxu0 0
    %659 = vmatprep.subr.bf16.mxu0 0
    %660 = vmatpush2.bf16.msra.mxu0 0
    %661 = vmatprep.subr.bf16.mxu0 0
    %662 = vmatpush2.bf16.msra.mxu0 0
    %663 = vmatprep.subr.bf16.mxu0 0
    %664 = vmatpush2.bf16.msra.mxu0 0
    %665 = vmatprep.subr.bf16.mxu0 0
    %666 = vmatpush2.bf16.msra.mxu0 0
    %667 = vmatprep.mubr.bf16.mxu0 0
    %668 = vmatmul.mubr.bf16.gmra.mxu0 %v630
    %v669 = vpop.f32.mrf.mxu0
    %v670 = vpop.f32.mrf.mxu0
    %v671 = vpop.f32.mrf.mxu0
    %v672 = vadd.f32 %v602, %v671
    %v673 = vpop.f32.mrf.mxu0
    %674 = vmatprep.mubr.bf16.mxu0 0
    %675 = vmatmul.mubr.bf16.gmra.mxu0 %v633
    %v676 = vpop.f32.mrf.mxu0
    %v677 = vpop.f32.mrf.mxu0
    %v678 = vpop.f32.mrf.mxu0
    %v679 = vadd.f32 %v602, %v678
    %v680 = vpop.f32.mrf.mxu0
    %681 = vdwg.mxu0
    %v682 = vmax.f32 %v672, 0.0
    %v683 = vmax.f32 %v679, 0.0
    %v684 = vpack.c.bf16 %v423, %v422
    %v685 = vpack.c.bf16 %v425, %v424
    %v686 = vld [vmem:[%s11] sm:$0xf]
    %v687 = vld [vmem:[%s11 + $0x4] sm:$0xf]
    %v688 = vld [vmem:[%s12] sm:$0x1]
    %v690 = vlaneseq
    %v691 = vshrl.u32 %v690, 7
    %v692 = vsub.s32 0, %v691
    %v693 = vrot.slane %v688, %v692
    %v697 = vunpack.c.l.b16 %v686
    %v698 = vunpack.c.l.b16 %v687
    %v699 = vpack.c.b16 %v698, %v697
    %v702 = vsel %vm172, %v684, 0
    %v705 = vsel %vm172, %v685, 0
    %707 = vmatprep.subr.bf16.mxu0 0
    %708 = vmatpush1.bf16.msra.mxu0 0
    %709 = vmatprep.subr.bf16.mxu0 0
    %710 = vmatpush1.bf16.msra.mxu0 0
    %711 = vmatprep.subr.bf16.mxu0 0
    %712 = vmatpush1.bf16.msra.mxu0 0
    %713 = vmatprep.subr.bf16.mxu0 0
    %714 = vmatpush1.bf16.msra.mxu0 0
    %715 = vmatprep.subr.bf16.mxu0 0
    %716 = vmatpush1.bf16.msra.mxu0 0
    %717 = vmatprep.subr.bf16.mxu0 0
    %718 = vmatpush1.bf16.msra.mxu0 0
    %719 = vmatprep.subr.bf16.mxu0 0
    %720 = vmatpush1.bf16.msra.mxu0 0
    %721 = vmatprep.subr.bf16.mxu0 0
    %722 = vmatpush1.bf16.msra.mxu0 %v699
    %723 = vmatprep.subr.bf16.mxu0 0
    %724 = vmatpush2.bf16.msra.mxu0 0
    %725 = vmatprep.subr.bf16.mxu0 0
    %726 = vmatpush2.bf16.msra.mxu0 0
    %727 = vmatprep.subr.bf16.mxu0 0
    %728 = vmatpush2.bf16.msra.mxu0 0
    %729 = vmatprep.subr.bf16.mxu0 0
    %730 = vmatpush2.bf16.msra.mxu0 0
    %731 = vmatprep.subr.bf16.mxu0 0
    %732 = vmatpush2.bf16.msra.mxu0 0
    %733 = vmatprep.subr.bf16.mxu0 0
    %734 = vmatpush2.bf16.msra.mxu0 0
    %735 = vmatprep.subr.bf16.mxu0 0
    %736 = vmatpush2.bf16.msra.mxu0 0
    %737 = vmatprep.subr.bf16.mxu0 0
    %738 = vmatpush2.bf16.msra.mxu0 0
    %739 = vmatprep.mubr.bf16.mxu0 0
    %740 = vmatmul.mubr.bf16.gmra.mxu0 %v702
    %v741 = vpop.f32.mrf.mxu0
    %v742 = vpop.f32.mrf.mxu0
    %v743 = vpop.f32.mrf.mxu0
    %v744 = vadd.f32 %v693, %v743
    %v745 = vpop.f32.mrf.mxu0
    %746 = vmatprep.mubr.bf16.mxu0 0
    %747 = vmatmul.mubr.bf16.gmra.mxu0 %v705
    %v748 = vpop.f32.mrf.mxu0
    %v749 = vpop.f32.mrf.mxu0
    %v750 = vpop.f32.mrf.mxu0
    %v751 = vadd.f32 %v693, %v750
    %v752 = vpop.f32.mrf.mxu0
    %753 = vdwg.mxu0
    %v754 = vadd.f32 %v682, %v744
    %v755 = vadd.f32 %v683, %v751
    %v756 = vmax.f32 %v754, 0.0
    %v757 = vmax.f32 %v755, 0.0
    %v758 = vpack.c.bf16 %v756, %v756
    %v759 = vpack.c.bf16 %v757, %v757
    %v760 = vld [vmem:[%s13] sm:$0xf]
    %v761 = vld [vmem:[%s13 + $0x4] sm:$0xf]
    %v762 = vld [vmem:[%s13 + $0x8] sm:$0xf]
    %v763 = vld [vmem:[%s13 + $0xc] sm:$0xf]
    %v764 = vld [vmem:[%s14] sm:$0x1]
    %v766 = vlaneseq
    %v767 = vshrl.u32 %v766, 7
    %v768 = vsub.s32 0, %v767
    %v769 = vrot.slane %v764, %v768
    %v773 = vunpack.c.l.b16 %v758
    %v774 = vunpack.c.l.b16 %v759
    %v775 = vrot.slane %v773, 7
    %v776 = vrot.slane %v774, 6
    %vm777 = vcmask 1041409
    %v778 = vsel %vm777, %v776, %v775
    %v779 = vpack.c.b16 %v778, %v778
    %v784 = vunpack.c.l.b16 %v760
    %v785 = vunpack.c.l.b16 %v761
    %v786 = vunpack.c.l.b16 %v762
    %v787 = vunpack.c.l.b16 %v763
    %v788 = vpack.c.b16 %v785, %v784
    %v789 = vpack.c.b16 %v787, %v786
    %v793 = vsel %vm289, %v779, 0
    %795 = vmatprep.subr.bf16.mxu0 0
    %796 = vmatpush1.bf16.msra.mxu0 0
    %797 = vmatprep.subr.bf16.mxu0 0
    %798 = vmatpush1.bf16.msra.mxu0 0
    %799 = vmatprep.subr.bf16.mxu0 0
    %800 = vmatpush1.bf16.msra.mxu0 0
    %801 = vmatprep.subr.bf16.mxu0 0
    %802 = vmatpush1.bf16.msra.mxu0 0
    %803 = vmatprep.subr.bf16.mxu0 0
    %804 = vmatpush1.bf16.msra.mxu0 0
    %805 = vmatprep.subr.bf16.mxu0 0
    %806 = vmatpush1.bf16.msra.mxu0 0
    %807 = vmatprep.subr.bf16.mxu0 0
    %808 = vmatpush1.bf16.msra.mxu0 %v789
    %809 = vmatprep.subr.bf16.mxu0 0
    %810 = vmatpush1.bf16.msra.mxu0 %v788
    %811 = vmatprep.subr.bf16.mxu0 0
    %812 = vmatpush2.bf16.msra.mxu0 0
    %813 = vmatprep.subr.bf16.mxu0 0
    %814 = vmatpush2.bf16.msra.mxu0 0
    %815 = vmatprep.subr.bf16.mxu0 0
    %816 = vmatpush2.bf16.msra.mxu0 0
    %817 = vmatprep.subr.bf16.mxu0 0
    %818 = vmatpush2.bf16.msra.mxu0 0
    %819 = vmatprep.subr.bf16.mxu0 0
    %820 = vmatpush2.bf16.msra.mxu0 0
    %821 = vmatprep.subr.bf16.mxu0 0
    %822 = vmatpush2.bf16.msra.mxu0 0
    %823 = vmatprep.subr.bf16.mxu0 0
    %824 = vmatpush2.bf16.msra.mxu0 0
    %825 = vmatprep.subr.bf16.mxu0 0
    %826 = vmatpush2.bf16.msra.mxu0 0
    %827 = vmatprep.mubr.bf16.mxu0 0
    %828 = vmatmul.mubr.bf16.gmra.mxu0 %v793
    %v829 = vpop.f32.mrf.mxu0
    %v830 = vadd.f32 %v769, %v829
    %v831 = vpop.f32.mrf.mxu0
    %v832 = vpop.f32.mrf.mxu0
    %v833 = vpop.f32.mrf.mxu0
    %834 = vdwg.mxu0
    %vm835 = vcmask 74752
    %836 = vst.msk [vmem:[#allocation2] sm:$0x3] %vm835, %v830
    // Predicated region
    $region62: #{tpu_custom_call.1} parent=1 // pred_check
      _
    $region63: #{tpu_custom_call.1} parent=1 // pred_check_branch
      %838 = sbr.rel (0) target = $region65
    $region64: #{tpu_custom_call.1} parent=1 // pred_region
      %s840 = ssub.s32 32, 32
      %841 = vsyncadd [#allocation3], %s840
      %s843 = sshll.u32 [#allocation2], 4
      %s844 = int_to_ptr.vmem [resolvable:$true] %s843
      %846 = dma.vmem_to_hbm [thread:$0]  %s844, 32, %s15, [#allocation3]
    $region65: #{tpu_custom_call.1} parent=1 // pred_fallthru
      _
    // Predicated region
    $region66: #{tpu_custom_call.1} parent=1 // pred_check
      _
    $region67: #{tpu_custom_call.1} parent=1 // pred_check_branch
      %848 = sbr.rel (0) target = $region69
    $region68: #{tpu_custom_call.1} parent=1 // pred_region
      %849 = dma.done [#allocation3], 32
    $region69: #{tpu_custom_call.1} parent=1 // pred_fallthru
      _
    %850 = vsyncpa [#allocation3], 1

</llo_original>
